<compile_context>
chip_gen: v7x
topology: tpu7x:2x2x1
jax: 0.10.0
libtpu: 0.0.40
codegen_flags: <defaults>
</compile_context>

<pallas_src>
import functools

import jax
import jax.numpy as jnp
from jax.experimental import pallas as pl
from jax.experimental.pallas import tpu as pltpu


# --------------------------------------------------------------------------- #
# Generation-aware sizing helpers
# --------------------------------------------------------------------------- #
def _vmem_capacity_bytes():
    """Physical VMEM of the current chip (128 MiB v5e/v6e, 64 MiB v7x)."""
    try:
        cap = int(pltpu.get_tpu_info().vmem_capacity_bytes)
        if cap > 0:
            return cap
    except Exception:
        pass
    return 64 * 2**20  # conservative (v7x-sized) default


def _vmem_limit(per_step_block_bytes, vmem_cap):
    """Scoped VMEM: ~2x (double-buffered) per-step blocks + slack, <= 75% physical."""
    want = 2 * per_step_block_bytes + (4 << 20)
    cap = (vmem_cap * 3) // 4          # ~96 MiB on 128-MiB parts, ~48 MiB on v7x
    return int(min(cap, max(16 << 20, want)))


def _spatial_tile(hw, c, itemsize, vmem_cap):
    """Lane-tile width over H*W: multiple of 128 (or full extent), budget ~VMEM/16."""
    budget = max(2 << 20, vmem_cap // 16)          # ~8 MiB (v5e/v6e) / ~4 MiB (v7x)
    t = (budget // max(1, c * itemsize)) // 128 * 128
    t = max(t, 128)
    if hw <= t:
        return hw                                   # full extent is always legal
    return t


# --------------------------------------------------------------------------- #
# Kernels
# --------------------------------------------------------------------------- #
def _fused_kernel(x_ref, w1_ref, b1_ref, w2_ref, b2_ref, o_ref, *, hw):
    """Single-pass pool + MLP + sigmoid + scale on a resident (C, HW) slab."""
    xb = x_ref[0]                                                       # (C, HW)
    # Max in native dtype; sum accumulates in f32 for precision.
    g_max = jnp.max(xb, axis=-1, keepdims=True).astype(jnp.float32)    # (C, 1)
    g_sum = jnp.sum(xb, axis=-1, keepdims=True, dtype=jnp.float32)     # (C, 1)
    pooled = jnp.concatenate([g_max, g_sum * (1.0 / hw)], axis=-1)     # (C, 2)
    h = jnp.dot(w1_ref[...], pooled,
                preferred_element_type=jnp.float32) + b1_ref[...]      # (Ch, 2)
    h = jnp.maximum(h, 0.0)                                            # ReLU
    z = jnp.dot(w2_ref[...], h,
                preferred_element_type=jnp.float32) + b2_ref[...]      # (C, 2)
    # Summing the two columns == proj(max) + proj(avg); b2 intentionally counted
    # twice, exactly as in the PyTorch reference.  Do NOT "fix" this.
    attn = jax.nn.sigmoid(z[:, 0:1] + z[:, 1:2]).astype(xb.dtype)      # (C, 1)
    o_ref[0] = (xb * attn).astype(o_ref.dtype)


def _pool_mlp_kernel(g_ref, w1_ref, b1_ref, w2_ref, b2_ref, attn_ref,
                     max_ref, sum_ref, *, hw, tile):
    """Phase 1: streaming max/sum over spatial tiles, then fused 2-column MLP."""
    j = pl.program_id(1)

    @pl.when(j == 0)
    def _init():
        max_ref[...] = jnp.full_like(max_ref, -jnp.inf)
        sum_ref[...] = jnp.zeros_like(sum_ref)

    gb = g_ref[0]                                                      # (C, tile)

    def _acc(block):
        max_ref[...] = jnp.maximum(
            max_ref[...],
            jnp.max(block, axis=-1, keepdims=True).astype(jnp.float32))
        sum_ref[...] = sum_ref[...] + jnp.sum(
            block, axis=-1, keepdims=True, dtype=jnp.float32)

    if hw % tile == 0:
        # No partial tile: never pay for the lane mask.
        _acc(gb)
    else:
        last = pl.num_programs(1) - 1

        @pl.when(j < last)
        def _full():
            _acc(gb)

        @pl.when(j == last)
        def _partial():
            lane = jax.lax.broadcasted_iota(jnp.int32, gb.shape, 1)
            valid = lane < (hw - j * tile)
            max_ref[...] = jnp.maximum(
                max_ref[...],
                jnp.max(jnp.where(valid, gb, -jnp.inf), axis=-1,
                        keepdims=True).astype(jnp.float32))
            sum_ref[...] = sum_ref[...] + jnp.sum(
                jnp.where(valid, gb, 0.0), axis=-1, keepdims=True,
                dtype=jnp.float32)

    @pl.when(j == pl.num_programs(1) - 1)
    def _finalize():
        # Fused projection: pack [max, avg] into one (C, 2) RHS.  ReLU is per
        # column, so summing the two output columns == proj(max) + proj(avg)
        # (b2 counted twice, matching PyTorch).
        pooled = jnp.concatenate(
            [max_ref[...], sum_ref[...] * (1.0 / hw)], axis=-1)        # (C, 2)
        h = jnp.dot(w1_ref[...], pooled,
                    preferred_element_type=jnp.float32) + b1_ref[...]  # (Ch, 2)
        h = jnp.maximum(h, 0.0)
        z = jnp.dot(w2_ref[...], h,
                    preferred_element_type=jnp.float32) + b2_ref[...]  # (C, 2)
        attn_ref[0] = jax.nn.sigmoid(z[:, 0:1] + z[:, 1:2])            # (C, 1)


def _scale_kernel(x_ref, attn_ref, o_ref):
    """Phase 2: pure streaming load -> broadcast multiply -> store."""
    o_ref[0] = (x_ref[0] * attn_ref[0]).astype(o_ref.dtype)


# --------------------------------------------------------------------------- #
# Wrapper
# --------------------------------------------------------------------------- #
def channel_attention(x, w1, b1, w2, b2, g=None, *,
                      _force_two_phase=False, _tile_override=None):
    """x, g: (N, C, H, W).  w1: (C//2, C), b1: (C//2, 1), w2: (C, C//2), b2: (C, 1)."""
    N, C, H, W = x.shape
    HW = H * W
    Ch = w1.shape[0]
    itemsize = x.dtype.itemsize

    xr = x.reshape(N, C, HW)
    gr = None if g is None else g.reshape(N, C, HW)

    vmem_cap = _vmem_capacity_bytes()
    cap = (vmem_cap * 3) // 4
    w_bytes = sum(int(a.size) * a.dtype.itemsize for a in (w1, b1, w2, b2))
    slab_bytes = C * HW * itemsize
    # Fused path needs 2 x (in slab + out slab) double-buffered + weights + slack.
    slab_limit = max(0, (cap - w_bytes - (4 << 20)) // 4)

    w_specs = [
        pl.BlockSpec((Ch, C), lambda *a: (0, 0), pipeline_mode=pl.Buffered(1)),
        pl.BlockSpec((Ch, 1), lambda *a: (0, 0), pipeline_mode=pl.Buffered(1)),
        pl.BlockSpec((C, Ch), lambda *a: (0, 0), pipeline_mode=pl.Buffered(1)),
        pl.BlockSpec((C, 1), lambda *a: (0, 0), pipeline_mode=pl.Buffered(1)),
    ]

    # ---------------- Fused single-pass path (2x HBM traffic) ---------------- #
    if (gr is None) and (not _force_two_phase) and (slab_bytes <= slab_limit):
        vmem_limit = _vmem_limit(2 * slab_bytes + w_bytes, vmem_cap)
        out = pl.pallas_call(
            functools.partial(_fused_kernel, hw=HW),
            out_shape=jax.ShapeDtypeStruct((N, C, HW), x.dtype),
            grid=(N,),
            in_specs=[pl.BlockSpec((1, C, HW), lambda n: (n, 0, 0))] + w_specs,
            out_specs=pl.BlockSpec((1, C, HW), lambda n: (n, 0, 0)),
            compiler_params=pltpu.CompilerParams(
                dimension_semantics=("parallel",),
                vmem_limit_bytes=vmem_limit),
        )(xr, w1, b1, w2, b2)
        return out.reshape(N, C, H, W)

    # ------------------------ Two-phase streaming path ----------------------- #
    gr2 = xr if gr is None else gr          # no duplicate stream when g is None
    tile = (_tile_override if _tile_override is not None
            else _spatial_tile(HW, C, itemsize, vmem_cap))
    n_t = pl.cdiv(HW, tile)
    tile_bytes = C * tile * itemsize

    # Phase 1: pooled (max, avg) reduction + fused 2-column MLP -> attn (N, C, 1).
    attn = pl.pallas_call(
        functools.partial(_pool_mlp_kernel, hw=HW, tile=tile),
        out_shape=jax.ShapeDtypeStruct((N, C, 1), jnp.float32),
        grid=(N, n_t),
        in_specs=[pl.BlockSpec((1, C, tile), lambda n, j: (n, 0, j))] + w_specs,
        out_specs=pl.BlockSpec((1, C, 1), lambda n, j: (n, 0, 0)),
        scratch_shapes=[pltpu.VMEM((C, 1), jnp.float32),   # running max
                        pltpu.VMEM((C, 1), jnp.float32)],  # running sum
        compiler_params=pltpu.CompilerParams(
            dimension_semantics=("parallel", "arbitrary"),
            vmem_limit_bytes=_vmem_limit(tile_bytes + w_bytes + C * 4, vmem_cap)),
    )(gr2, w1, b1, w2, b2)

    # Cast attn once so the hot phase-2 multiply runs in x's native dtype.
    attn_x = attn.astype(x.dtype)

    # Phase 2: lane-dense streaming scale: out = x * attn (attn broadcast over HW).
    out = pl.pallas_call(
        _scale_kernel,
        out_shape=jax.ShapeDtypeStruct((N, C, HW), x.dtype),
        grid=(N, n_t),
        in_specs=[
            pl.BlockSpec((1, C, tile), lambda n, j: (n, 0, j)),   # x (streamed)
            pl.BlockSpec((1, C, 1), lambda n, j: (n, 0, 0)),      # attn (resident per n)
        ],
        out_specs=pl.BlockSpec((1, C, tile), lambda n, j: (n, 0, j)),
        compiler_params=pltpu.CompilerParams(
            dimension_semantics=("parallel", "parallel"),
            vmem_limit_bytes=_vmem_limit(2 * tile_bytes + C * itemsize, vmem_cap)),
    )(xr, attn_x)
    return out.reshape(N, C, H, W)


# --------------------------------------------------------------------------- #
# Pure-JAX reference
# --------------------------------------------------------------------------- #
def _reference(x, w1, b1, w2, b2, g=None):
    if g is None:
        g = x
    g_max = jnp.max(g, axis=(2, 3), keepdims=True)           # (N, C, 1, 1)
    g_avg = jnp.mean(g, axis=(2, 3), keepdims=True)

    def proj(p):
        h = jnp.einsum('oc,ncxy->noxy', w1, p) + b1[None, :, :, None]
        h = jnp.maximum(h, 0.0)
        return jnp.einsum('oc,ncxy->noxy', w2, h) + b2[None, :, :, None]

    attn = jax.nn.sigmoid(proj(g_max) + proj(g_avg))
    return x * attn


if __name__ == "__main__":
    key = jax.random.PRNGKey(0)

    def make_params(C, k):
        Ch = C // 2
        kw1, kb1, kw2, kb2 = jax.random.split(k, 4)
        w1 = jax.random.normal(kw1, (Ch, C), jnp.float32) * 0.2
        b1 = jax.random.normal(kb1, (Ch, 1), jnp.float32) * 0.1
        w2 = jax.random.normal(kw2, (C, Ch), jnp.float32) * 0.2
        b2 = jax.random.normal(kb2, (C, 1), jnp.float32) * 0.1
        return w1, b1, w2, b2

    k1, k2, k3, k4, k5 = jax.random.split(key, 5)

    # Test 1: fused single-pass path (g is None, per-batch slab fits VMEM).
    N, C, H, W = 2, 8, 16, 16          # embed = 8 -> hidden = 4
    x = jax.random.normal(k1, (N, C, H, W), dtype=jnp.float32)
    w1, b1, w2, b2 = make_params(C, k2)
    out = jax.block_until_ready(channel_attention(x, w1, b1, w2, b2))
    ref = _reference(x, w1, b1, w2, b2)
    assert out.shape == (N, C, H, W)
    assert jnp.allclose(out, ref, atol=1e-5, rtol=1e-5), "fused path mismatch"

    # Test 2: two-phase path with a partial last spatial tile (HW % tile != 0).
    N2, C2, H2, W2 = 1, 16, 9, 21      # HW = 189, tile = 128 -> masked last tile
    x2 = jax.random.normal(k3, (N2, C2, H2, W2), dtype=jnp.float32)
    w1b, b1b, w2b, b2b = make_params(C2, k4)
    out2 = jax.block_until_ready(
        channel_attention(x2, w1b, b1b, w2b, b2b,
                          _force_two_phase=True, _tile_override=128))
    ref2 = _reference(x2, w1b, b1b, w2b, b2b)
    assert jnp.allclose(out2, ref2, atol=1e-5, rtol=1e-5), "two-phase (masked) mismatch"

    # Test 3: explicit g (two-phase, full-extent spatial block).
    g3 = jax.random.normal(k5, (N2, C2, H2, W2), dtype=jnp.float32)
    out3 = jax.block_until_ready(channel_attention(x2, w1b, b1b, w2b, b2b, g=g3))
    ref3 = _reference(x2, w1b, b1b, w2b, b2b, g=g3)
    assert jnp.allclose(out3, ref3, atol=1e-5, rtol=1e-5), "explicit-g mismatch"

    print("KERNEL_OK")
</pallas_src>

<mosaic_0001>
module attributes {stable_mosaic.version = 11 : i64} {
  func.func @_fused_kernel(%arg0: i32, %arg1: memref<1x8x256xf32, #tpu.memory_space<vmem>>, %arg2: memref<4x8xf32, #tpu.memory_space<vmem>>, %arg3: memref<4x1xf32, #tpu.memory_space<vmem>>, %arg4: memref<8x4xf32, #tpu.memory_space<vmem>>, %arg5: memref<8x1xf32, #tpu.memory_space<vmem>>, %arg6: memref<1x8x256xf32, #tpu.memory_space<vmem>>) attributes {dimension_semantics = [#tpu.dimension_semantics<parallel>], iteration_bounds = array<i64: 2>, scalar_prefetch = 0 : i64, scratch_operands = 0 : i64, tpu.core_type = #tpu.core_type<tc>, window_params = [{transform_indices = @transform_0, window_bounds = array<i64: 1, 8, 256>}, {pipeline_mode = #tpu.pipeline_mode<synchronous>, transform_indices = @transform_1, window_bounds = array<i64: 4, 8>}, {pipeline_mode = #tpu.pipeline_mode<synchronous>, transform_indices = @transform_2, window_bounds = array<i64: 4, 1>}, {pipeline_mode = #tpu.pipeline_mode<synchronous>, transform_indices = @transform_3, window_bounds = array<i64: 8, 4>}, {pipeline_mode = #tpu.pipeline_mode<synchronous>, transform_indices = @transform_4, window_bounds = array<i64: 8, 1>}, {transform_indices = @transform_5, window_bounds = array<i64: 1, 8, 256>}]} {
    %c0 = arith.constant 0 : index
    %c0_0 = arith.constant 0 : index
    %c0_1 = arith.constant 0 : index
    %0 = vector.load %arg1[%c0, %c0_0, %c0_1] : memref<1x8x256xf32, #tpu.memory_space<vmem>>, vector<1x8x256xf32>
    %1 = vector.shape_cast %0 : vector<1x8x256xf32> to vector<8x256xf32>
    %cst = arith.constant dense<0xFF800000> : vector<8xf32>
    %2 = vector.multi_reduction <maximumf>, %1, %cst [1] : vector<8x256xf32> to vector<8xf32>
    %3 = vector.shape_cast %2 : vector<8xf32> to vector<8x1xf32>
    %cst_2 = arith.constant dense<0.000000e+00> : vector<8xf32>
    %4 = vector.multi_reduction <add>, %1, %cst_2 [1] : vector<8x256xf32> to vector<8xf32>
    %5 = vector.shape_cast %4 : vector<8xf32> to vector<8x1xf32>
    %cst_3 = arith.constant 3.906250e-03 : f32
    %6 = vector.broadcast %cst_3 : f32 to vector<8x1xf32>
    %7 = arith.mulf %5, %6 : vector<8x1xf32>
    %8 = tpu.concatenate %3, %7 in 1 : vector<8x1xf32>, vector<8x1xf32> -> vector<8x2xf32>
    %c0_4 = arith.constant 0 : index
    %c0_5 = arith.constant 0 : index
    %9 = vector.load %arg2[%c0_4, %c0_5] : memref<4x8xf32, #tpu.memory_space<vmem>>, vector<4x8xf32>
    %cst_6 = arith.constant dense<0.000000e+00> : vector<4x2xf32>
    %10 = tpu.matmul %9, %8, %cst_6 {dimension_numbers = #tpu.dot_dimension_numbers<[1], [0], [0], [1], [0, 0, 1, 1], [], []>} : vector<4x8xf32>, vector<8x2xf32>, vector<4x2xf32> -> vector<4x2xf32>
    %c0_7 = arith.constant 0 : index
    %c0_8 = arith.constant 0 : index
    %11 = vector.load %arg3[%c0_7, %c0_8] : memref<4x1xf32, #tpu.memory_space<vmem>>, vector<4x1xf32>
    %12 = vector.broadcast %11 : vector<4x1xf32> to vector<4x2xf32>
    %13 = arith.addf %10, %12 : vector<4x2xf32>
    %cst_9 = arith.constant 0.000000e+00 : f32
    %14 = vector.broadcast %cst_9 : f32 to vector<4x2xf32>
    %15 = arith.maximumf %13, %14 : vector<4x2xf32>
    %c0_10 = arith.constant 0 : index
    %c0_11 = arith.constant 0 : index
    %16 = vector.load %arg4[%c0_10, %c0_11] : memref<8x4xf32, #tpu.memory_space<vmem>>, vector<8x4xf32>
    %cst_12 = arith.constant dense<0.000000e+00> : vector<8x2xf32>
    %17 = tpu.matmul %16, %15, %cst_12 {dimension_numbers = #tpu.dot_dimension_numbers<[1], [0], [0], [1], [0, 0, 1, 1], [], []>} : vector<8x4xf32>, vector<4x2xf32>, vector<8x2xf32> -> vector<8x2xf32>
    %c0_13 = arith.constant 0 : index
    %c0_14 = arith.constant 0 : index
    %18 = vector.load %arg5[%c0_13, %c0_14] : memref<8x1xf32, #tpu.memory_space<vmem>>, vector<8x1xf32>
    %19 = vector.broadcast %18 : vector<8x1xf32> to vector<8x2xf32>
    %20 = arith.addf %17, %19 : vector<8x2xf32>
    %21 = vector.extract_strided_slice %20 {offsets = [0, 0], sizes = [8, 1], strides = [1, 1]} : vector<8x2xf32> to vector<8x1xf32>
    %22 = vector.extract_strided_slice %20 {offsets = [0, 1], sizes = [8, 1], strides = [1, 1]} : vector<8x2xf32> to vector<8x1xf32>
    %23 = arith.addf %21, %22 : vector<8x1xf32>
    %24 = arith.negf %23 : vector<8x1xf32>
    %25 = math.exp %24 : vector<8x1xf32>
    %cst_15 = arith.constant 1.000000e+00 : f32
    %26 = vector.broadcast %cst_15 : f32 to vector<8x1xf32>
    %27 = arith.addf %26, %25 : vector<8x1xf32>
    %28 = arith.divf %26, %27 : vector<8x1xf32>
    %29 = vector.broadcast %28 : vector<8x1xf32> to vector<8x256xf32>
    %30 = arith.mulf %1, %29 : vector<8x256xf32>
    %c0_16 = arith.constant 0 : index
    %c0_17 = arith.constant 0 : index
    %c0_18 = arith.constant 0 : index
    %31 = vector.load %arg6[%c0_16, %c0_17, %c0_18] : memref<1x8x256xf32, #tpu.memory_space<vmem>>, vector<1x8x256xf32>
    %32 = vector.shape_cast %31 : vector<1x8x256xf32> to vector<8x256xf32>
    %33 = vector.shape_cast %30 : vector<8x256xf32> to vector<1x8x256xf32>
    tpu.vector_store %arg6[%c0_16, %c0_17, %c0_18], %33 {strides = array<i32>} : memref<1x8x256xf32, #tpu.memory_space<vmem>>, vector<1x8x256xf32>,
    return
  }
  func.func @transform_0(%arg0: i32) -> (i32, i32, i32) {
    %c0_i32 = arith.constant 0 : i32
    %c0_i32_0 = arith.constant 0 : i32
    %c0_i32_1 = arith.constant 0 : i32
    return %arg0, %c0_i32, %c0_i32_0 : i32, i32, i32
  }
  func.func @transform_1(%arg0: i32) -> (i32, i32) {
    %c0_i32 = arith.constant 0 : i32
    %c0_i32_0 = arith.constant 0 : i32
    %c0_i32_1 = arith.constant 0 : i32
    return %c0_i32, %c0_i32_0 : i32, i32
  }
  func.func @transform_2(%arg0: i32) -> (i32, i32) {
    %c0_i32 = arith.constant 0 : i32
    %c0_i32_0 = arith.constant 0 : i32
    %c0_i32_1 = arith.constant 0 : i32
    return %c0_i32, %c0_i32_0 : i32, i32
  }
  func.func @transform_3(%arg0: i32) -> (i32, i32) {
    %c0_i32 = arith.constant 0 : i32
    %c0_i32_0 = arith.constant 0 : i32
    %c0_i32_1 = arith.constant 0 : i32
    return %c0_i32, %c0_i32_0 : i32, i32
  }
  func.func @transform_4(%arg0: i32) -> (i32, i32) {
    %c0_i32 = arith.constant 0 : i32
    %c0_i32_0 = arith.constant 0 : i32
    %c0_i32_1 = arith.constant 0 : i32
    return %c0_i32, %c0_i32_0 : i32, i32
  }
  func.func @transform_5(%arg0: i32) -> (i32, i32, i32) {
    %c0_i32 = arith.constant 0 : i32
    %c0_i32_0 = arith.constant 0 : i32
    %c0_i32_1 = arith.constant 0 : i32
    return %arg0, %c0_i32, %c0_i32_0 : i32, i32, i32
  }
}

</mosaic_0001>

<llo_original>
// kernel: tpu_custom_call.1
$region0: #{tpu_custom_call.1}
  #allocation0 [shape = 'u32[]', space=smem, size = 0x4, offset = 0x4, fixed_abs, tag = 'smem constant byte address 0x4 - core index']
  #allocation1 [shape = 'u32[144,128]{1,0:T(1,128)}', space=vmem, size = 0x12000, scoped, tag = 'internal scratch']
  %s0 = inlined_call_operand.hbm [shape: f32[2,8,256], index: 0, kind: input, shape index: {}]
  %s1 = inlined_call_operand.vmem [shape: f32[4,8], index: 1, kind: input, shape index: {}]
  %s2 = inlined_call_operand.vmem [shape: f32[4,1], index: 2, kind: input, shape index: {}]
  %s3 = inlined_call_operand.vmem [shape: f32[8,4], index: 3, kind: input, shape index: {}]
  %s4 = inlined_call_operand.vmem [shape: f32[8,1], index: 4, kind: input, shape index: {}]
  %s5 = inlined_call_operand.hbm [shape: f32[2,8,256], index: 5, kind: output, shape index: {}]
  %s6 = sld [smem:[#allocation0]]
  $region57: #{tpu_custom_call.1} parent=0
    _
  %s8 = ssub.s32 1, %s6
  %s9 = scalar_select 0, %s8, %s6
  $region1: #{tpu_custom_call.1} parent=0
    #allocation2 [shape = 'u8[16384]{0}', space=vmem, size = 0x4000, scoped, tag = 'input window, operand 0']
    #allocation3 [shape = 's32[2]{0}', space=sflag, size = 0x8, scoped, tag = 'scoped memory for tpu_custom_call.1']
    #allocation4 [shape = 's32[2]{0}', space=sflag, size = 0x8, scoped, tag = 'scoped memory for tpu_custom_call.1']
    #allocation5 [shape = 'u8[16384]{0}', space=vmem, size = 0x4000, scoped, tag = 'output window, operand 0']
    %10 = vsyncpa [#allocation3], 0
    %s11 = scalar_lea.sflag [#allocation3], 1
    %12 = vsyncpa %s11, 0
    %13 = vsyncpa [#allocation4], 0
    %s14 = scalar_lea.sflag [#allocation4], 1
    %15 = vsyncpa %s14, 0
    loop: start=0, step=1, limit=4
    $region2: #{tpu_custom_call.1} parent=1 // loop_pre_header
      _
    $region3: #{tpu_custom_call.1} parent=1 // loop_header
      %s17 = sphi 0, %s21
      %p18 = scmp.ge.s32.totalorder %s17, 4
      %s27 = sphi 0, %s29
      %s30 = sphi 0, %s27
      %s31 = sphi 0, %s30
      %s47 = sphi 0, %s31
      %s51 = sphi 0, %s51
      %s53 = sphi 0, %s51
      %s54 = sphi 0, %s53
      %s68 = sphi 0, %s54
      %s72 = sphi 0, %s72
      %s74 = sphi 0, %s72
      %s75 = sphi 0, %s74
      %s89 = sphi 0, %s75
      %s93 = sphi 0, %s93
      %s95 = sphi 0, %s93
      %s96 = sphi 0, %s95
      %s110 = sphi 0, %s96
      %s114 = sphi 0, %s114
      %s116 = sphi 0, %s114
      %s117 = sphi 0, %s116
      %s131 = sphi 0, %s117
      %s137 = sphi 0, %s139
      %s140 = sphi 0, %s137
      %s141 = sphi 0, %s140
      %s157 = sphi 0, %s141
    $region4: #{tpu_custom_call.1} parent=1 // loop_header_branch
      %20 = sbr.rel (%p18) target = $region8
    $region5: #{tpu_custom_call.1} parent=1 // loop_body
      %s22 = ssub.s32 %s17, 1
      %s23 = ssub.s32 %s17, 2
      %s24 = sadd.s32 %s17, 1
      %s25 = ssub.s32 %s17, %s24
      %p26 = scmp.eq.s32.totalorder %s25, 0
      %s28 = sadd.s32 %s27, 1
      %s29 = scalar_select %p26, %s27, %s28
      %p32 = pneg %p26
      %p33 = scmp.eq.s32.totalorder %s17, 1
      %p34 = por %p32, %p33
      %p35 = scmp.ne.s32.totalorder %s27, %s30
      %p36 = scmp.eq.s32.totalorder %s17, 0
      %p37 = por %p35, %p36
      %p38 = scmp.ne.s32.totalorder %s27, %s30
      %p39 = scmp.eq.s32.totalorder %s22, 1
      %p40 = por %p38, %p39
      %p41 = scmp.ne.s32.totalorder %s30, %s31
      %p42 = scmp.eq.s32.totalorder %s22, 0
      %p43 = por %p41, %p42
      %p44 = scmp.ne.s32.totalorder %s30, %s31
      %p45 = scmp.eq.s32.totalorder %s23, 1
      %p46 = por %p44, %p45
      %p48 = scmp.ne.s32.totalorder %s31, %s47
      %p49 = scmp.eq.s32.totalorder %s23, 0
      %p50 = por %p48, %p49
      %s52 = sadd.s32 %s51, 1
      %p55 = scmp.eq.s32.totalorder %s17, 1
      %p56 = scmp.ne.s32.totalorder %s51, %s53
      %p57 = scmp.eq.s32.totalorder %s17, 0
      %p58 = por %p56, %p57
      %p59 = scmp.ne.s32.totalorder %s51, %s53
      %p60 = scmp.eq.s32.totalorder %s22, 1
      %p61 = por %p59, %p60
      %p62 = scmp.ne.s32.totalorder %s53, %s54
      %p63 = scmp.eq.s32.totalorder %s22, 0
      %p64 = por %p62, %p63
      %p65 = scmp.ne.s32.totalorder %s53, %s54
      %p66 = scmp.eq.s32.totalorder %s23, 1
      %p67 = por %p65, %p66
      %p69 = scmp.ne.s32.totalorder %s54, %s68
      %p70 = scmp.eq.s32.totalorder %s23, 0
      %p71 = por %p69, %p70
      %s73 = sadd.s32 %s72, 1
      %p76 = scmp.eq.s32.totalorder %s17, 1
      %p77 = scmp.ne.s32.totalorder %s72, %s74
      %p78 = scmp.eq.s32.totalorder %s17, 0
      %p79 = por %p77, %p78
      %p80 = scmp.ne.s32.totalorder %s72, %s74
      %p81 = scmp.eq.s32.totalorder %s22, 1
      %p82 = por %p80, %p81
      %p83 = scmp.ne.s32.totalorder %s74, %s75
      %p84 = scmp.eq.s32.totalorder %s22, 0
      %p85 = por %p83, %p84
      %p86 = scmp.ne.s32.totalorder %s74, %s75
      %p87 = scmp.eq.s32.totalorder %s23, 1
      %p88 = por %p86, %p87
      %p90 = scmp.ne.s32.totalorder %s75, %s89
      %p91 = scmp.eq.s32.totalorder %s23, 0
      %p92 = por %p90, %p91
      %s94 = sadd.s32 %s93, 1
      %p97 = scmp.eq.s32.totalorder %s17, 1
      %p98 = scmp.ne.s32.totalorder %s93, %s95
      %p99 = scmp.eq.s32.totalorder %s17, 0
      %p100 = por %p98, %p99
      %p101 = scmp.ne.s32.totalorder %s93, %s95
      %p102 = scmp.eq.s32.totalorder %s22, 1
      %p103 = por %p101, %p102
      %p104 = scmp.ne.s32.totalorder %s95, %s96
      %p105 = scmp.eq.s32.totalorder %s22, 0
      %p106 = por %p104, %p105
      %p107 = scmp.ne.s32.totalorder %s95, %s96
      %p108 = scmp.eq.s32.totalorder %s23, 1
      %p109 = por %p107, %p108
      %p111 = scmp.ne.s32.totalorder %s96, %s110
      %p112 = scmp.eq.s32.totalorder %s23, 0
      %p113 = por %p111, %p112
      %s115 = sadd.s32 %s114, 1
      %p118 = scmp.eq.s32.totalorder %s17, 1
      %p119 = scmp.ne.s32.totalorder %s114, %s116
      %p120 = scmp.eq.s32.totalorder %s17, 0
      %p121 = por %p119, %p120
      %p122 = scmp.ne.s32.totalorder %s114, %s116
      %p123 = scmp.eq.s32.totalorder %s22, 1
      %p124 = por %p122, %p123
      %p125 = scmp.ne.s32.totalorder %s116, %s117
      %p126 = scmp.eq.s32.totalorder %s22, 0
      %p127 = por %p125, %p126
      %p128 = scmp.ne.s32.totalorder %s116, %s117
      %p129 = scmp.eq.s32.totalorder %s23, 1
      %p130 = por %p128, %p129
      %p132 = scmp.ne.s32.totalorder %s117, %s131
      %p133 = scmp.eq.s32.totalorder %s23, 0
      %p134 = por %p132, %p133
      %s135 = ssub.s32 %s17, %s24
      %p136 = scmp.eq.s32.totalorder %s135, 0
      %s138 = sadd.s32 %s137, 1
      %s139 = scalar_select %p136, %s137, %s138
      %p142 = pneg %p136
      %p143 = scmp.eq.s32.totalorder %s17, 1
      %p144 = por %p142, %p143
      %p145 = scmp.ne.s32.totalorder %s137, %s140
      %p146 = scmp.eq.s32.totalorder %s17, 0
      %p147 = por %p145, %p146
      %p148 = scmp.ne.s32.totalorder %s137, %s140
      %p149 = scmp.eq.s32.totalorder %s22, 1
      %p150 = por %p148, %p149
      %p151 = scmp.ne.s32.totalorder %s140, %s141
      %p152 = scmp.eq.s32.totalorder %s22, 0
      %p153 = por %p151, %p152
      %p154 = scmp.ne.s32.totalorder %s140, %s141
      %p155 = scmp.eq.s32.totalorder %s23, 1
      %p156 = por %p154, %p155
      %p158 = scmp.ne.s32.totalorder %s141, %s157
      %p159 = scmp.eq.s32.totalorder %s23, 0
      %p160 = por %p158, %p159
      %p161 = scmp.le.s32.totalorder 1, %s17
      %p162 = scmp.lt.s32.totalorder %s17, 3
      %p163 = pnand %p161, %p162
      %p164 = pneg %p163
      // Predicated region
      $region9: #{tpu_custom_call.1} parent=5 // pred_check
        _
      $region10: #{tpu_custom_call.1} parent=5 // pred_check_branch
        %166 = sbr.rel (%p163) target = $region12
      $region11: #{tpu_custom_call.1} parent=5 // pred_region
        %s167 = ssub.s32 %s17, 1
        // Predicated region
        $region13: #{tpu_custom_call.1} parent=11 // pred_check
          %p168 = pneg %p64
        $region14: #{tpu_custom_call.1} parent=11 // pred_check_branch
          %170 = sbr.rel (%p168) target = $region16
        $region15: #{tpu_custom_call.1} parent=11 // pred_region
          _
        $region16: #{tpu_custom_call.1} parent=11 // pred_fallthru
          _
        // Predicated region
        $region17: #{tpu_custom_call.1} parent=11 // pred_check
          %p171 = pneg %p85
        $region18: #{tpu_custom_call.1} parent=11 // pred_check_branch
          %173 = sbr.rel (%p171) target = $region20
        $region19: #{tpu_custom_call.1} parent=11 // pred_region
          _
        $region20: #{tpu_custom_call.1} parent=11 // pred_fallthru
          _
        // Predicated region
        $region21: #{tpu_custom_call.1} parent=11 // pred_check
          %p174 = pneg %p106
        $region22: #{tpu_custom_call.1} parent=11 // pred_check_branch
          %176 = sbr.rel (%p174) target = $region24
        $region23: #{tpu_custom_call.1} parent=11 // pred_region
          _
        $region24: #{tpu_custom_call.1} parent=11 // pred_fallthru
          _
        // Predicated region
        $region25: #{tpu_custom_call.1} parent=11 // pred_check
          %p177 = pneg %p127
        $region26: #{tpu_custom_call.1} parent=11 // pred_check_branch
          %179 = sbr.rel (%p177) target = $region28
        $region27: #{tpu_custom_call.1} parent=11 // pred_region
          _
        $region28: #{tpu_custom_call.1} parent=11 // pred_fallthru
          _
      $region12: #{tpu_custom_call.1} parent=5 // pred_fallthru
        _
      %p180 = scmp.lt.s32.totalorder %s17, 2
      // Predicated region
      $region29: #{tpu_custom_call.1} parent=5 // pred_check
        %p181 = pneg %p180
      $region30: #{tpu_custom_call.1} parent=5 // pred_check_branch
        %183 = sbr.rel (%p181) target = $region32
      $region31: #{tpu_custom_call.1} parent=5 // pred_region
        // Predicated region
        $region33: #{tpu_custom_call.1} parent=31 // pred_check
          %p184 = pneg %p37
        $region34: #{tpu_custom_call.1} parent=31 // pred_check_branch
          %186 = sbr.rel (%p184) target = $region36
        $region35: #{tpu_custom_call.1} parent=31 // pred_region
          %s187 = sand.u32 %s27, 1
          %s188 = scalar_lea.sflag [#allocation3], %s187
          %s189 = sand.u32 %s27, 1
          %s190 = smul.addr %s189, 16
          %s191 = scalar_lea.vmem [#allocation2], %s190
          %s193 = ssub.s32 256, 256
          %194 = vsyncadd %s188, %s193
          %s195 = smul.addr %s17, 2
          %s196 = smul.addr %s195, 128
          %s197 = scalar_lea.hbm %s0, %s196
          %s199 = sshll.u32 %s191, 4
          %s200 = int_to_ptr.vmem [resolvable:$true] %s199
          %202 = dma.hbm_to_vmem [thread:$0]  %s197, 256, %s200, %s188
        $region36: #{tpu_custom_call.1} parent=31 // pred_fallthru
          _
      $region32: #{tpu_custom_call.1} parent=5 // pred_fallthru
        _
      %p203 = scmp.le.s32.totalorder 1, %s17
      %p204 = scmp.lt.s32.totalorder %s17, 3
      %p205 = pnand %p203, %p204
      %p206 = pneg %p205
      // Predicated region
      $region37: #{tpu_custom_call.1} parent=5 // pred_check
        _
      $region38: #{tpu_custom_call.1} parent=5 // pred_check_branch
        %208 = sbr.rel (%p205) target = $region40
      $region39: #{tpu_custom_call.1} parent=5 // pred_region
        %s209 = ssub.s32 %s17, 1
        %s210 = sand.u32 %s30, 1
        %s211 = scalar_lea.sflag [#allocation3], %s210
        %s212 = sand.u32 %s30, 1
        %s213 = smul.addr %s212, 16
        %s214 = scalar_lea.vmem [#allocation2], %s213
        // Predicated region
        $region41: #{tpu_custom_call.1} parent=39 // pred_check
          %p215 = pneg %p43
        $region42: #{tpu_custom_call.1} parent=39 // pred_check_branch
          %217 = sbr.rel (%p215) target = $region44
        $region43: #{tpu_custom_call.1} parent=39 // pred_region
          %218 = dma.done %s211, 256
        $region44: #{tpu_custom_call.1} parent=39 // pred_fallthru
          _
        %s219 = sand.u32 %s30, 1
        %s220 = scalar_lea.sflag [#allocation3], %s219
        %s221 = sand.u32 %s30, 1
        %s222 = smul.addr %s221, 16
        %s223 = scalar_lea.vmem [#allocation2], %s222
        %p224 = pneg %p43
        %p225 = pneg %p40
        %p226 = pneg %p64
        %p227 = pneg %p61
        %p228 = pneg %p85
        %p229 = pneg %p82
        %p230 = pneg %p106
        %p231 = pneg %p103
        %p232 = pneg %p127
        %p233 = pneg %p124
        %p234 = pneg %p153
        %p235 = pneg %p150
        %s236 = sand.u32 %s140, 1
        %s237 = scalar_lea.sflag [#allocation4], %s236
        %s238 = sand.u32 %s140, 1
        %s239 = smul.addr %s238, 16
        %s240 = scalar_lea.vmem [#allocation5], %s239
        %v241 = vld [vmem:[%s214] sm:$0xff]
        %v242 = vld [vmem:[%s214 + $0x8] sm:$0xff]
        %v243 = vmax.f32 %v241, %v242
        %244 = vmax.xlane.f32.xlu0 %v243
        %v245 = vpop.xlane.xlu0 %244
        %v246 = vadd.f32 %v241, %v242
        %247 = vadd.xlane.f32.xlu0 %v246
        %v248 = vpop.xlane.xlu0 %247
        %v249 = vmul.f32 %v248, 0.00390625
        %vm250 = vcmask 7168
        %v251 = vsel %vm250, %v245, %v249
        %v252 = vld [vmem:[%s1] sm:$0xf]
        %v253 = vld [vmem:[%s2] sm:$0xf]
        %255 = vset.pattern.permute.xlu0 0
        %256 = vperm.xlu0 %255, %v253
        %v257 = vpop.permute.xlu0 %256
        %vm259 = vcmask 64512
        %v261 = vsel %vm259, %v252, 0
        %263 = vmatprep.subr.mxu0 0.0
        %264 = vmatpush1.msra.mxu0 %v251
        %265 = vmatprep.subr.mxu0 0.0
        %266 = vmatpush1.msra.mxu0 0.0
        %267 = vmatprep.subr.mxu0 0.0
        %268 = vmatpush1.msra.mxu0 0.0
        %269 = vmatprep.subr.mxu0 0.0
        %270 = vmatpush1.msra.mxu0 0.0
        %271 = vmatprep.subr.mxu0 0.0
        %272 = vmatpush1.msra.mxu0 0.0
        %273 = vmatprep.subr.mxu0 0.0
        %274 = vmatpush1.msra.mxu0 0.0
        %275 = vmatprep.subr.mxu0 0.0
        %276 = vmatpush1.msra.mxu0 0.0
        %277 = vmatprep.subr.mxu0 0.0
        %278 = vmatpush1.msra.mxu0 0.0
        %279 = vmatprep.subr.mxu0 0.0
        %280 = vmatpush1.msra.mxu0 0.0
        %281 = vmatprep.subr.mxu0 0.0
        %282 = vmatpush1.msra.mxu0 0.0
        %283 = vmatprep.subr.mxu0 0.0
        %284 = vmatpush1.msra.mxu0 0.0
        %285 = vmatprep.subr.mxu0 0.0
        %286 = vmatpush1.msra.mxu0 0.0
        %287 = vmatprep.subr.mxu0 0.0
        %288 = vmatpush1.msra.mxu0 0.0
        %289 = vmatprep.subr.mxu0 0.0
        %290 = vmatpush1.msra.mxu0 0.0
        %291 = vmatprep.subr.mxu0 0.0
        %292 = vmatpush1.msra.mxu0 0.0
        %293 = vmatprep.subr.mxu0 0.0
        %294 = vmatpush1.msra.mxu0 0.0
        %295 = vmatprep.subr.mxu0 0.0
        %296 = vmatpush1.msra.mxu0 0.0
        %297 = vmatprep.subr.mxu0 0.0
        %298 = vmatpush1.msra.mxu0 0.0
        %299 = vmatprep.subr.mxu0 0.0
        %300 = vmatpush1.msra.mxu0 0.0
        %301 = vmatprep.subr.mxu0 0.0
        %302 = vmatpush1.msra.mxu0 0.0
        %303 = vmatprep.subr.mxu0 0.0
        %304 = vmatpush1.msra.mxu0 0.0
        %305 = vmatprep.subr.mxu0 0.0
        %306 = vmatpush1.msra.mxu0 0.0
        %307 = vmatprep.subr.mxu0 0.0
        %308 = vmatpush1.msra.mxu0 0.0
        %309 = vmatprep.subr.mxu0 0.0
        %310 = vmatpush1.msra.mxu0 0.0
        %311 = vmatprep.subr.mxu0 0.0
        %312 = vmatpush1.msra.mxu0 0.0
        %313 = vmatprep.subr.mxu0 0.0
        %314 = vmatpush1.msra.mxu0 0.0
        %315 = vmatprep.subr.mxu0 0.0
        %316 = vmatpush1.msra.mxu0 0.0
        %317 = vmatprep.subr.mxu0 0.0
        %318 = vmatpush1.msra.mxu0 0.0
        %319 = vmatprep.subr.mxu0 0.0
        %320 = vmatpush1.msra.mxu0 0.0
        %321 = vmatprep.subr.mxu0 0.0
        %322 = vmatpush1.msra.mxu0 0.0
        %323 = vmatprep.subr.mxu0 0.0
        %324 = vmatpush1.msra.mxu0 0.0
        %325 = vmatprep.subr.mxu0 0.0
        %326 = vmatpush1.msra.mxu0 0.0
        %327 = vmatprep.mubr.f32.mxu0 0.0
        %328 = vmatmul.mubr.f32.gmra.mrb[0].mxu0 %v261
        %v329 = vpop.f32.mrb[0].mxu0
        %v330 = vadd.f32 %v257, %v329
        %v331 = vpop.f32.mrb[0].mxu0
        %332 = vdwg.mxu0
        %v333 = vmax.f32 %v330, 0.0
        %v334 = vld [vmem:[%s3] sm:$0xff]
        %v335 = vld [vmem:[%s4] sm:$0xff]
        %337 = vset.pattern.permute.xlu0 0
        %338 = vperm.xlu0 %337, %v335
        %v339 = vpop.permute.xlu0 %338
        %vm341 = vcmask 31744
        %v343 = vsel %vm341, %v334, 0
        %vm345 = vcmask 1043456
        %v347 = vsel %vm345, %v333, 0
        %349 = vmatprep.subr.mxu0 0.0
        %350 = vmatpush1.msra.mxu0 %v347
        %351 = vmatprep.subr.mxu0 0.0
        %352 = vmatpush1.msra.mxu0 0.0
        %353 = vmatprep.subr.mxu0 0.0
        %354 = vmatpush1.msra.mxu0 0.0
        %355 = vmatprep.subr.mxu0 0.0
        %356 = vmatpush1.msra.mxu0 0.0
        %357 = vmatprep.subr.mxu0 0.0
        %358 = vmatpush1.msra.mxu0 0.0
        %359 = vmatprep.subr.mxu0 0.0
        %360 = vmatpush1.msra.mxu0 0.0
        %361 = vmatprep.subr.mxu0 0.0
        %362 = vmatpush1.msra.mxu0 0.0
        %363 = vmatprep.subr.mxu0 0.0
        %364 = vmatpush1.msra.mxu0 0.0
        %365 = vmatprep.subr.mxu0 0.0
        %366 = vmatpush1.msra.mxu0 0.0
        %367 = vmatprep.subr.mxu0 0.0
        %368 = vmatpush1.msra.mxu0 0.0
        %369 = vmatprep.subr.mxu0 0.0
        %370 = vmatpush1.msra.mxu0 0.0
        %371 = vmatprep.subr.mxu0 0.0
        %372 = vmatpush1.msra.mxu0 0.0
        %373 = vmatprep.subr.mxu0 0.0
        %374 = vmatpush1.msra.mxu0 0.0
        %375 = vmatprep.subr.mxu0 0.0
        %376 = vmatpush1.msra.mxu0 0.0
        %377 = vmatprep.subr.mxu0 0.0
        %378 = vmatpush1.msra.mxu0 0.0
        %379 = vmatprep.subr.mxu0 0.0
        %380 = vmatpush1.msra.mxu0 0.0
        %381 = vmatprep.subr.mxu0 0.0
        %382 = vmatpush1.msra.mxu0 0.0
        %383 = vmatprep.subr.mxu0 0.0
        %384 = vmatpush1.msra.mxu0 0.0
        %385 = vmatprep.subr.mxu0 0.0
        %386 = vmatpush1.msra.mxu0 0.0
        %387 = vmatprep.subr.mxu0 0.0
        %388 = vmatpush1.msra.mxu0 0.0
        %389 = vmatprep.subr.mxu0 0.0
        %390 = vmatpush1.msra.mxu0 0.0
        %391 = vmatprep.subr.mxu0 0.0
        %392 = vmatpush1.msra.mxu0 0.0
        %393 = vmatprep.subr.mxu0 0.0
        %394 = vmatpush1.msra.mxu0 0.0
        %395 = vmatprep.subr.mxu0 0.0
        %396 = vmatpush1.msra.mxu0 0.0
        %397 = vmatprep.subr.mxu0 0.0
        %398 = vmatpush1.msra.mxu0 0.0
        %399 = vmatprep.subr.mxu0 0.0
        %400 = vmatpush1.msra.mxu0 0.0
        %401 = vmatprep.subr.mxu0 0.0
        %402 = vmatpush1.msra.mxu0 0.0
        %403 = vmatprep.subr.mxu0 0.0
        %404 = vmatpush1.msra.mxu0 0.0
        %405 = vmatprep.subr.mxu0 0.0
        %406 = vmatpush1.msra.mxu0 0.0
        %407 = vmatprep.subr.mxu0 0.0
        %408 = vmatpush1.msra.mxu0 0.0
        %409 = vmatprep.subr.mxu0 0.0
        %410 = vmatpush1.msra.mxu0 0.0
        %411 = vmatprep.subr.mxu0 0.0
        %412 = vmatpush1.msra.mxu0 0.0
        %413 = vmatprep.mubr.f32.mxu0 0.0
        %414 = vmatmul.mubr.f32.gmra.mrb[0].mxu0 %v343
        %v415 = vpop.f32.mrb[0].mxu0
        %v416 = vadd.f32 %v339, %v415
        %v417 = vpop.f32.mrb[0].mxu0
        %418 = vdwg.mxu0
        %420 = vrot.lane.b32.xlu0 %v416, 127
        %v421 = vpop.permute.xlu0 %420
        %v423 = vadd.f32 %v416, %v421
        %v424 = vxor.u32 %v423, 2147483648
        %v425 = vmul.f32 %v424, 1.442695
        %v426 = vpow.pop %v425
        %v427 = vadd.f32 %v426, 1.0
        %v428 = vrcp.pop %v427
        %v429 = vmul.f32 1.0, %v428
        %431 = vset.pattern.permute.xlu0 0
        %432 = vperm.xlu0 %431, %v429
        %v433 = vpop.permute.xlu0 %432
        %v435 = vmul.f32 %v241, %v433
        %v436 = vmul.f32 %v242, %v433
        %437 = vst [vmem:[%s240] sm:$0xff] %v435
        %438 = vst [vmem:[%s240 + $0x8] sm:$0xff] %v436
        %s439 = sand.u32 %s140, 1
        %s440 = scalar_lea.sflag [#allocation4], %s439
        %s441 = sand.u32 %s140, 1
        %s442 = smul.addr %s441, 16
        %s443 = scalar_lea.vmem [#allocation5], %s442
        // Predicated region
        $region45: #{tpu_custom_call.1} parent=39 // pred_check
          %p444 = pneg %p150
        $region46: #{tpu_custom_call.1} parent=39 // pred_check_branch
          %446 = sbr.rel (%p444) target = $region48
        $region47: #{tpu_custom_call.1} parent=39 // pred_region
          %s448 = ssub.s32 256, 256
          %449 = vsyncadd %s440, %s448
          %s450 = smul.addr %s22, 2
          %s451 = smul.addr %s450, 128
          %s452 = scalar_lea.hbm %s5, %s451
          %s454 = sshll.u32 %s443, 4
          %s455 = int_to_ptr.vmem [resolvable:$true] %s454
          %457 = dma.vmem_to_hbm [thread:$0]  %s455, 256, %s452, %s440
        $region48: #{tpu_custom_call.1} parent=39 // pred_fallthru
          _
      $region40: #{tpu_custom_call.1} parent=5 // pred_fallthru
        _
      %p458 = scmp.le.s32.totalorder 2, %s17
      // Predicated region
      $region49: #{tpu_custom_call.1} parent=5 // pred_check
        %p459 = pneg %p458
      $region50: #{tpu_custom_call.1} parent=5 // pred_check_branch
        %461 = sbr.rel (%p459) target = $region52
      $region51: #{tpu_custom_call.1} parent=5 // pred_region
        %s462 = ssub.s32 %s17, 2
        // Predicated region
        $region53: #{tpu_custom_call.1} parent=51 // pred_check
          %p463 = pneg %p156
        $region54: #{tpu_custom_call.1} parent=51 // pred_check_branch
          %465 = sbr.rel (%p463) target = $region56
        $region55: #{tpu_custom_call.1} parent=51 // pred_region
          %s466 = sand.u32 %s141, 1
          %s467 = scalar_lea.sflag [#allocation4], %s466
          %s468 = sand.u32 %s141, 1
          %s469 = smul.addr %s468, 16
          %s470 = scalar_lea.vmem [#allocation5], %s469
          %471 = dma.done %s467, 256
        $region56: #{tpu_custom_call.1} parent=51 // pred_fallthru
          _
      $region52: #{tpu_custom_call.1} parent=5 // pred_fallthru
        _
    $region6: #{tpu_custom_call.1} parent=1 // loop_footer
      %s21 = sadd.s32 1, %s17
    $region7: #{tpu_custom_call.1} parent=1 // loop_footer_branch
      %16 = sbr.rel target = $region3
    $region8: #{tpu_custom_call.1} parent=1 // loop_exit
      _
    %472 = vsyncpa [#allocation3], 1
    %s473 = scalar_lea.sflag [#allocation3], 1
    %474 = vsyncpa %s473, 1
    %475 = vsyncpa [#allocation4], 1
    %s476 = scalar_lea.sflag [#allocation4], 1
    %477 = vsyncpa %s476, 1

</llo_original>
